<compile_context>
chip_gen: v7x
topology: tpu7x:2x2x1
jax: 0.10.0
libtpu: 0.0.40
codegen_flags: <defaults>
</compile_context>

<pallas_src>
import functools
import math

import jax
import jax.numpy as jnp
from jax import lax
from jax.experimental import pallas as pl
from jax.experimental.pallas import tpu as pltpu

_NEG_BIG = -1e30  # finite "masked" value: exp(_NEG_BIG - m) underflows to 0.


# --------------------------------------------------------------------------- #
# Kernel 1: fused QKV projection (one (ts, D) @ (D, 3*dh) matmul per head).
# Grid (B, S//ts, H), H innermost so the x tile is loaded once per (b, si).
# The 1/sqrt(dh) scale is pre-folded into the Q columns of weight/bias.
# --------------------------------------------------------------------------- #
def _qkv_proj_kernel(x_ref, w_ref, b_ref, q_ref, k_ref, v_ref):
    dh = q_ref.shape[-1]
    y = jnp.dot(x_ref[0], w_ref[0], preferred_element_type=jnp.float32)
    y = y + b_ref[0].astype(jnp.float32)                       # (ts, 3*dh)
    q_ref[0, 0] = y[:, 0 * dh:1 * dh].astype(q_ref.dtype)
    k_ref[0, 0] = y[:, 1 * dh:2 * dh].astype(k_ref.dtype)
    v_ref[0, 0] = y[:, 2 * dh:3 * dh].astype(v_ref.dtype)


# --------------------------------------------------------------------------- #
# Kernel 2: attention with online softmax.  Grid (B, H, S//tq); K/V for the
# whole sequence of one (batch, head) are VMEM-resident (their block index is
# constant across q tiles -> DMA'd from HBM once per (b, h)).  The KV loop
# runs inside the kernel, so no state crosses grid invocations.
# --------------------------------------------------------------------------- #
def _flash_attn_kernel(q_ref, k_ref, v_ref, o_ref, m_sc, l_sc, acc_sc, *,
                       kv_chunk: int, causal: bool):
    qi = pl.program_id(2)
    tq = q_ref.shape[2]
    s_len = k_ref.shape[2]
    n_chunks = s_len // kv_chunk

    m_sc[...] = jnp.full(m_sc.shape, -jnp.inf, dtype=m_sc.dtype)
    l_sc[...] = jnp.zeros(l_sc.shape, dtype=l_sc.dtype)
    acc_sc[...] = jnp.zeros(acc_sc.shape, dtype=acc_sc.dtype)

    def chunk_step(j, masked):
        start = pl.multiple_of(j * kv_chunk, kv_chunk)
        q = q_ref[0, 0]                                        # (tq, dh), pre-scaled
        k = k_ref[0, 0, pl.ds(start, kv_chunk), :]             # (tkv, dh)
        v = v_ref[0, 0, pl.ds(start, kv_chunk), :]             # (tkv, dh)
        s = lax.dot_general(q, k, (((1,), (1,)), ((), ())),
                            preferred_element_type=jnp.float32)  # (tq, tkv)
        if masked:  # only diagonal-straddling chunks pay for the iota mask
            row = qi * tq + lax.broadcasted_iota(jnp.int32, s.shape, 0)
            col = start + lax.broadcasted_iota(jnp.int32, s.shape, 1)
            s = jnp.where(col > row, _NEG_BIG, s)
        m_prev = m_sc[...]
        m_new = jnp.maximum(m_prev, jnp.max(s, axis=-1, keepdims=True))
        alpha = jnp.exp(m_prev - m_new)
        p = jnp.exp(s - m_new)
        l_sc[...] = alpha * l_sc[...] + jnp.sum(p, axis=-1, keepdims=True)
        acc_sc[...] = alpha * acc_sc[...] + jnp.dot(
            p.astype(v.dtype), v, preferred_element_type=jnp.float32)
        m_sc[...] = m_new

    def run_nomask(j, carry):
        chunk_step(j, False)
        return carry

    def run_masked(j, carry):
        chunk_step(j, True)
        return carry

    if causal:
        row0 = qi * tq
        n_nomask = (row0 + 1) // kv_chunk             # fully-visible chunks
        n_used = (row0 + tq - 1) // kv_chunk + 1      # through last straddler
        lax.fori_loop(0, n_nomask, run_nomask, 0)
        lax.fori_loop(n_nomask, n_used, run_masked, 0)
    else:
        lax.fori_loop(0, n_chunks, run_nomask, 0)

    # Exact normalization (no approximate reciprocal).
    o_ref[0, 0] = (acc_sc[...] / l_sc[...]).astype(o_ref.dtype)


# --------------------------------------------------------------------------- #
# Kernel 3: out_proj.  One grid step per (b, s-tile); W_out VMEM-resident,
# heads reduced inside the step, lane-dense (ts, D) output stores.
# --------------------------------------------------------------------------- #
def _out_proj_kernel(o_ref, w_ref, b_ref, y_ref):
    n_heads = o_ref.shape[1]
    acc = jnp.dot(o_ref[0, 0], w_ref[0], preferred_element_type=jnp.float32)
    for h in range(1, n_heads):
        acc = acc + jnp.dot(o_ref[0, h], w_ref[h],
                            preferred_element_type=jnp.float32)
    y_ref[0] = (acc + b_ref[...].astype(jnp.float32)).astype(y_ref.dtype)


# --------------------------------------------------------------------------- #
# Wrapper
# --------------------------------------------------------------------------- #
def self_attention(x, w_in, b_in, w_out, b_out, *, n_heads: int,
                   causal: bool = False, q_tile: int = 512,
                   kv_tile: int = 512, s_tile: int = 512):
    """x: (B, S, D). w_in: (D, 3D), b_in: (3D,), w_out: (D, D), b_out: (D,).

    Weights are the PyTorch Linear weights pre-transposed (y = x @ W + b).
    Works in the input dtype (bf16 or f32) with f32 accumulation.
    """
    B, S, D = x.shape
    H = n_heads
    dh = D // H
    assert H * dh == D, "d_embed must be divisible by n_heads"

    ts = min(s_tile, S)
    tq = min(q_tile, S)
    tkv = min(kv_tile, S)
    assert S % ts == 0 and S % tq == 0 and S % tkv == 0, "S must divide tiles"

    # One-time per-head weight re-layout (folds away under jit with constant
    # weights).  1/sqrt(dh) is folded into the Q weight/bias here.
    scale = 1.0 / math.sqrt(dh)
    wq = w_in[:, 0 * D:1 * D].reshape(D, H, dh).transpose(1, 0, 2) * scale
    wk = w_in[:, 1 * D:2 * D].reshape(D, H, dh).transpose(1, 0, 2)
    wv = w_in[:, 2 * D:3 * D].reshape(D, H, dh).transpose(1, 0, 2)
    w3 = jnp.concatenate([wq, wk, wv], axis=-1)                 # (H, D, 3*dh)
    bq = b_in[0 * D:1 * D].reshape(H, dh) * scale
    bk = b_in[1 * D:2 * D].reshape(H, dh)
    bv = b_in[2 * D:3 * D].reshape(H, dh)
    b3 = jnp.concatenate([bq, bk, bv], axis=-1).reshape(H, 1, 3 * dh)
    w_out_h = w_out.reshape(H, dh, D)                           # (H, dh, D)
    b_out2 = b_out.reshape(1, D)

    qkv_shape = jax.ShapeDtypeStruct((B, H, S, dh), x.dtype)

    # ---- 1) fused QKV projection, head-major output ------------------------
    q, k, v = pl.pallas_call(
        _qkv_proj_kernel,
        out_shape=(qkv_shape, qkv_shape, qkv_shape),
        grid_spec=pltpu.PrefetchScalarGridSpec(
            num_scalar_prefetch=0,
            grid=(B, S // ts, H),                               # H innermost
            in_specs=[
                pl.BlockSpec((1, ts, D), lambda b, si, h: (b, si, 0)),      # x
                pl.BlockSpec((1, D, 3 * dh), lambda b, si, h: (h, 0, 0)),   # W
                pl.BlockSpec((1, 1, 3 * dh), lambda b, si, h: (h, 0, 0)),   # b
            ],
            out_specs=(
                pl.BlockSpec((1, 1, ts, dh), lambda b, si, h: (b, h, si, 0)),
                pl.BlockSpec((1, 1, ts, dh), lambda b, si, h: (b, h, si, 0)),
                pl.BlockSpec((1, 1, ts, dh), lambda b, si, h: (b, h, si, 0)),
            ),
        ),
        compiler_params=pltpu.CompilerParams(
            dimension_semantics=("parallel", "parallel", "arbitrary")),
    )(x, w3, b3)

    # ---- 2) attention (online softmax, K/V resident per (b, h)) ------------
    attn_kernel = functools.partial(_flash_attn_kernel,
                                    kv_chunk=tkv, causal=causal)
    o = pl.pallas_call(
        attn_kernel,
        out_shape=jax.ShapeDtypeStruct((B, H, S, dh), x.dtype),
        grid_spec=pltpu.PrefetchScalarGridSpec(
            num_scalar_prefetch=0,
            grid=(B, H, S // tq),
            in_specs=[
                pl.BlockSpec((1, 1, tq, dh), lambda b, h, qi: (b, h, qi, 0)),
                pl.BlockSpec((1, 1, S, dh), lambda b, h, qi: (b, h, 0, 0)),
                pl.BlockSpec((1, 1, S, dh), lambda b, h, qi: (b, h, 0, 0)),
            ],
            out_specs=pl.BlockSpec((1, 1, tq, dh),
                                   lambda b, h, qi: (b, h, qi, 0)),
            scratch_shapes=[
                pltpu.VMEM((tq, 1), jnp.float32),    # running max m
                pltpu.VMEM((tq, 1), jnp.float32),    # running denom l
                pltpu.VMEM((tq, dh), jnp.float32),   # output accumulator
            ]),
        compiler_params=pltpu.CompilerParams(
            dimension_semantics=("parallel", "parallel", "parallel")),
    )(q, k, v)

    # ---- 3) out_proj (W_out resident, lane-dense D-wide output) ------------
    y = pl.pallas_call(
        _out_proj_kernel,
        out_shape=jax.ShapeDtypeStruct((B, S, D), x.dtype),
        grid_spec=pltpu.PrefetchScalarGridSpec(
            num_scalar_prefetch=0,
            grid=(B, S // ts),
            in_specs=[
                pl.BlockSpec((1, H, ts, dh), lambda b, si: (b, 0, si, 0)),  # O
                pl.BlockSpec((H, dh, D), lambda b, si: (0, 0, 0)),   # W_out
                pl.BlockSpec((1, D), lambda b, si: (0, 0)),          # bias
            ],
            out_specs=pl.BlockSpec((1, ts, D), lambda b, si: (b, si, 0)),
        ),
        compiler_params=pltpu.CompilerParams(
            dimension_semantics=("parallel", "parallel")),
    )(o, w_out_h, b_out2)

    return y


# --------------------------------------------------------------------------- #
# Pure-JAX reference (replicates the PyTorch forward exactly)
# --------------------------------------------------------------------------- #
def _reference(x, w_in, b_in, w_out, b_out, n_heads, causal=False):
    B, S, D = x.shape
    dh = D // n_heads
    qkv = x @ w_in + b_in
    q, k, v = jnp.split(qkv, 3, axis=-1)
    q = q.reshape(B, S, n_heads, dh).transpose(0, 2, 1, 3)
    k = k.reshape(B, S, n_heads, dh).transpose(0, 2, 1, 3)
    v = v.reshape(B, S, n_heads, dh).transpose(0, 2, 1, 3)
    w = jnp.einsum("bhqd,bhkd->bhqk", q, k) / math.sqrt(dh)
    if causal:
        mask = jnp.triu(jnp.ones((S, S), bool), 1)
        w = jnp.where(mask, -jnp.inf, w)
    a = jax.nn.softmax(w, axis=-1)
    o = jnp.einsum("bhqk,bhkd->bhqd", a, v)
    o = o.transpose(0, 2, 1, 3).reshape(B, S, D)
    return o @ w_out + b_out


if __name__ == "__main__":
    # Small shapes consistent with the module: (batch, seq, d_embed).
    B, S, D, H = 2, 16, 32, 4

    key = jax.random.PRNGKey(0)
    k_x, k_wi, k_bi, k_wo, k_bo = jax.random.split(key, 5)

    x = jax.random.normal(k_x, (B, S, D), dtype=jnp.float32)
    w_in = jax.random.normal(k_wi, (D, 3 * D), dtype=jnp.float32) / math.sqrt(D)
    b_in = jax.random.normal(k_bi, (3 * D,), dtype=jnp.float32) * 0.02
    w_out = jax.random.normal(k_wo, (D, D), dtype=jnp.float32) / math.sqrt(D)
    b_out = jax.random.normal(k_bo, (D,), dtype=jnp.float32) * 0.02

    # Non-causal, small tiles so the multi-chunk online-softmax path runs.
    out = jax.block_until_ready(self_attention(
        x, w_in, b_in, w_out, b_out, n_heads=H, causal=False,
        q_tile=8, kv_tile=8, s_tile=8))
    ref = _reference(x, w_in, b_in, w_out, b_out, H, causal=False)
    assert out.shape == (B, S, D)
    assert bool(jnp.allclose(out, ref, atol=5e-2, rtol=5e-2)), (
        "mismatch vs reference (non-causal): max abs err = "
        f"{float(jnp.max(jnp.abs(out - ref)))}")

    # Causal: exercises dynamic loop bounds + diagonal-only masking.
    out_c = jax.block_until_ready(self_attention(
        x, w_in, b_in, w_out, b_out, n_heads=H, causal=True,
        q_tile=8, kv_tile=8, s_tile=8))
    ref_c = _reference(x, w_in, b_in, w_out, b_out, H, causal=True)
    assert bool(jnp.allclose(out_c, ref_c, atol=5e-2, rtol=5e-2)), (
        "mismatch vs reference (causal): max abs err = "
        f"{float(jnp.max(jnp.abs(out_c - ref_c)))}")

    # bf16 operands with f32 accumulation (default tiles, clamped to S).
    out_bf = jax.block_until_ready(self_attention(
        x.astype(jnp.bfloat16), w_in.astype(jnp.bfloat16),
        b_in.astype(jnp.bfloat16), w_out.astype(jnp.bfloat16),
        b_out.astype(jnp.bfloat16), n_heads=H, causal=False))
    assert out_bf.shape == (B, S, D)
    assert bool(jnp.all(jnp.isfinite(out_bf.astype(jnp.float32))))

    print("KERNEL_OK")
</pallas_src>

<mosaic_0001>
module attributes {stable_mosaic.version = 11 : i64} {
  func.func @_qkv_proj_kernel(%arg0: i32, %arg1: i32, %arg2: i32, %arg3: memref<1x8x32xf32, #tpu.memory_space<vmem>>, %arg4: memref<1x32x24xf32, #tpu.memory_space<vmem>>, %arg5: memref<1x1x24xf32, #tpu.memory_space<vmem>>, %arg6: memref<1x1x8x8xf32, #tpu.memory_space<vmem>>, %arg7: memref<1x1x8x8xf32, #tpu.memory_space<vmem>>, %arg8: memref<1x1x8x8xf32, #tpu.memory_space<vmem>>) attributes {dimension_semantics = [#tpu.dimension_semantics<parallel>, #tpu.dimension_semantics<parallel>, #tpu.dimension_semantics<arbitrary>], iteration_bounds = array<i64: 2, 2, 4>, scalar_prefetch = 0 : i64, scratch_operands = 0 : i64, tpu.core_type = #tpu.core_type<tc>, window_params = [{transform_indices = @transform_0, window_bounds = array<i64: 1, 8, 32>}, {transform_indices = @transform_1, window_bounds = array<i64: 1, 32, 24>}, {transform_indices = @transform_2, window_bounds = array<i64: 1, 1, 24>}, {transform_indices = @transform_3, window_bounds = array<i64: 1, 1, 8, 8>}, {transform_indices = @transform_4, window_bounds = array<i64: 1, 1, 8, 8>}, {transform_indices = @transform_5, window_bounds = array<i64: 1, 1, 8, 8>}]} {
    %c0 = arith.constant 0 : index
    %c0_0 = arith.constant 0 : index
    %c0_1 = arith.constant 0 : index
    %0 = vector.load %arg3[%c0, %c0_0, %c0_1] : memref<1x8x32xf32, #tpu.memory_space<vmem>>, vector<1x8x32xf32>
    %1 = vector.shape_cast %0 : vector<1x8x32xf32> to vector<8x32xf32>
    %c0_2 = arith.constant 0 : index
    %c0_3 = arith.constant 0 : index
    %c0_4 = arith.constant 0 : index
    %2 = vector.load %arg4[%c0_2, %c0_3, %c0_4] : memref<1x32x24xf32, #tpu.memory_space<vmem>>, vector<1x32x24xf32>
    %3 = vector.shape_cast %2 : vector<1x32x24xf32> to vector<32x24xf32>
    %cst = arith.constant dense<0.000000e+00> : vector<8x24xf32>
    %4 = tpu.matmul %1, %3, %cst {dimension_numbers = #tpu.dot_dimension_numbers<[1], [0], [0], [1], [0, 0, 1, 1], [], []>} : vector<8x32xf32>, vector<32x24xf32>, vector<8x24xf32> -> vector<8x24xf32>
    %c0_5 = arith.constant 0 : index
    %c0_6 = arith.constant 0 : index
    %c0_7 = arith.constant 0 : index
    %5 = vector.load %arg5[%c0_5, %c0_6, %c0_7] : memref<1x1x24xf32, #tpu.memory_space<vmem>>, vector<1x1x24xf32>
    %6 = vector.shape_cast %5 : vector<1x1x24xf32> to vector<1x24xf32>
    %7 = vector.broadcast %6 : vector<1x24xf32> to vector<8x24xf32>
    %8 = arith.addf %4, %7 : vector<8x24xf32>
    %9 = vector.extract_strided_slice %8 {offsets = [0, 0], sizes = [8, 8], strides = [1, 1]} : vector<8x24xf32> to vector<8x8xf32>
    %c0_8 = arith.constant 0 : index
    %c0_9 = arith.constant 0 : index
    %c0_10 = arith.constant 0 : index
    %c0_11 = arith.constant 0 : index
    %10 = vector.load %arg6[%c0_8, %c0_9, %c0_10, %c0_11] : memref<1x1x8x8xf32, #tpu.memory_space<vmem>>, vector<1x1x8x8xf32>
    %11 = vector.shape_cast %10 : vector<1x1x8x8xf32> to vector<8x8xf32>
    %12 = vector.shape_cast %9 : vector<8x8xf32> to vector<1x1x8x8xf32>
    tpu.vector_store %arg6[%c0_8, %c0_9, %c0_10, %c0_11], %12 {strides = array<i32>} : memref<1x1x8x8xf32, #tpu.memory_space<vmem>>, vector<1x1x8x8xf32>,
    %13 = vector.extract_strided_slice %8 {offsets = [0, 8], sizes = [8, 8], strides = [1, 1]} : vector<8x24xf32> to vector<8x8xf32>
    %c0_12 = arith.constant 0 : index
    %c0_13 = arith.constant 0 : index
    %c0_14 = arith.constant 0 : index
    %c0_15 = arith.constant 0 : index
    %14 = vector.load %arg7[%c0_12, %c0_13, %c0_14, %c0_15] : memref<1x1x8x8xf32, #tpu.memory_space<vmem>>, vector<1x1x8x8xf32>
    %15 = vector.shape_cast %14 : vector<1x1x8x8xf32> to vector<8x8xf32>
    %16 = vector.shape_cast %13 : vector<8x8xf32> to vector<1x1x8x8xf32>
    tpu.vector_store %arg7[%c0_12, %c0_13, %c0_14, %c0_15], %16 {strides = array<i32>} : memref<1x1x8x8xf32, #tpu.memory_space<vmem>>, vector<1x1x8x8xf32>,
    %17 = vector.extract_strided_slice %8 {offsets = [0, 16], sizes = [8, 8], strides = [1, 1]} : vector<8x24xf32> to vector<8x8xf32>
    %c0_16 = arith.constant 0 : index
    %c0_17 = arith.constant 0 : index
    %c0_18 = arith.constant 0 : index
    %c0_19 = arith.constant 0 : index
    %18 = vector.load %arg8[%c0_16, %c0_17, %c0_18, %c0_19] : memref<1x1x8x8xf32, #tpu.memory_space<vmem>>, vector<1x1x8x8xf32>
    %19 = vector.shape_cast %18 : vector<1x1x8x8xf32> to vector<8x8xf32>
    %20 = vector.shape_cast %17 : vector<8x8xf32> to vector<1x1x8x8xf32>
    tpu.vector_store %arg8[%c0_16, %c0_17, %c0_18, %c0_19], %20 {strides = array<i32>} : memref<1x1x8x8xf32, #tpu.memory_space<vmem>>, vector<1x1x8x8xf32>,
    return
  }
  func.func @transform_0(%arg0: i32, %arg1: i32, %arg2: i32) -> (i32, i32, i32) {
    %c0_i32 = arith.constant 0 : i32
    %c0_i32_0 = arith.constant 0 : i32
    return %arg0, %arg1, %c0_i32 : i32, i32, i32
  }
  func.func @transform_1(%arg0: i32, %arg1: i32, %arg2: i32) -> (i32, i32, i32) {
    %c0_i32 = arith.constant 0 : i32
    %c0_i32_0 = arith.constant 0 : i32
    %c0_i32_1 = arith.constant 0 : i32
    return %arg2, %c0_i32, %c0_i32_0 : i32, i32, i32
  }
  func.func @transform_2(%arg0: i32, %arg1: i32, %arg2: i32) -> (i32, i32, i32) {
    %c0_i32 = arith.constant 0 : i32
    %c0_i32_0 = arith.constant 0 : i32
    %c0_i32_1 = arith.constant 0 : i32
    return %arg2, %c0_i32, %c0_i32_0 : i32, i32, i32
  }
  func.func @transform_3(%arg0: i32, %arg1: i32, %arg2: i32) -> (i32, i32, i32, i32) {
    %c0_i32 = arith.constant 0 : i32
    %c0_i32_0 = arith.constant 0 : i32
    return %arg0, %arg2, %arg1, %c0_i32 : i32, i32, i32, i32
  }
  func.func @transform_4(%arg0: i32, %arg1: i32, %arg2: i32) -> (i32, i32, i32, i32) {
    %c0_i32 = arith.constant 0 : i32
    %c0_i32_0 = arith.constant 0 : i32
    return %arg0, %arg2, %arg1, %c0_i32 : i32, i32, i32, i32
  }
  func.func @transform_5(%arg0: i32, %arg1: i32, %arg2: i32) -> (i32, i32, i32, i32) {
    %c0_i32 = arith.constant 0 : i32
    %c0_i32_0 = arith.constant 0 : i32
    return %arg0, %arg2, %arg1, %c0_i32 : i32, i32, i32, i32
  }
}

</mosaic_0001>

<llo_original>
// kernel: tpu_custom_call.1
$region0: #{tpu_custom_call.1}
  #allocation0 [shape = 'u32[]', space=smem, size = 0x4, offset = 0x4, fixed_abs, tag = 'smem constant byte address 0x4 - core index']
  #allocation1 [shape = 'u32[144,128]{1,0:T(1,128)}', space=vmem, size = 0x12000, scoped, tag = 'internal scratch']
  %s0 = inlined_call_operand.vmem [shape: f32[2,16,32], index: 0, kind: input, shape index: {}]
  %s1 = inlined_call_operand.vmem [shape: f32[4,32,24], index: 1, kind: input, shape index: {}]
  %s2 = inlined_call_operand.vmem [shape: f32[4,1,24], index: 2, kind: input, shape index: {}]
  %s3 = inlined_call_operand.vmem [shape: f32[2,4,16,8], index: 3, kind: output, shape index: {0}]
  %s4 = inlined_call_operand.vmem [shape: f32[2,4,16,8], index: 4, kind: output, shape index: {1}]
  %s5 = inlined_call_operand.vmem [shape: f32[2,4,16,8], index: 5, kind: output, shape index: {2}]
  %6 = xla_tuple %s3, %s4, %s5
  %s7 = sld [smem:[#allocation0]]
  $region61: #{tpu_custom_call.1} parent=0
    _
  %s9 = ssub.s32 1, %s7
  %s10 = scalar_select 0, %s9, %s7
  loop: start=0, step=1, limit=18
  $region2: #{tpu_custom_call.1} parent=0 // loop_pre_header
    _
  $region3: #{tpu_custom_call.1} parent=0 // loop_header
    %s12 = sphi 0, %s16
    %p13 = scmp.ge.s32.totalorder %s12, 18
    %s19 = sphi 0, %s38
    %s20 = sphi 0, %s34
    %s21 = sphi 0, %s30
    %s22 = sphi 0, %s19
    %s23 = sphi 0, %s20
    %s24 = sphi 0, %s21
    %s25 = sphi 0, %s22
    %s26 = sphi 0, %s23
    %s27 = sphi 0, %s24
    %s43 = sphi 0, %s45
    %s46 = sphi 0, %s43
    %s47 = sphi 0, %s46
    %s63 = sphi 0, %s47
    %s69 = sphi 0, %s71
    %s72 = sphi 0, %s69
    %s73 = sphi 0, %s72
    %s89 = sphi 0, %s73
    %s95 = sphi 0, %s97
    %s98 = sphi 0, %s95
    %s99 = sphi 0, %s98
    %s115 = sphi 0, %s99
    %s125 = sphi 0, %s127
    %s128 = sphi 0, %s125
    %s129 = sphi 0, %s128
    %s145 = sphi 0, %s129
    %s155 = sphi 0, %s157
    %s158 = sphi 0, %s155
    %s159 = sphi 0, %s158
    %s175 = sphi 0, %s159
    %s185 = sphi 0, %s187
    %s188 = sphi 0, %s185
    %s189 = sphi 0, %s188
    %s205 = sphi 0, %s189
  $region4: #{tpu_custom_call.1} parent=0 // loop_header_branch
    %15 = sbr.rel (%p13) target = $region8
  $region5: #{tpu_custom_call.1} parent=0 // loop_body
    %s17 = ssub.s32 %s12, 1
    %s18 = ssub.s32 %s12, 2
    %s28 = sadd.s32 1, %s21
    %p29 = scmp.ge.s32.totalorder %s28, 4
    %s30 = scalar_select %p29, 0, %s28
    %s31 = sadd.s32 1, %s20
    %s32 = scalar_select %p29, %s31, %s20
    %p33 = scmp.ge.s32.totalorder %s32, 2
    %s34 = scalar_select %p33, 0, %s32
    %s35 = sadd.s32 1, %s19
    %s36 = scalar_select %p33, %s35, %s19
    %p37 = scmp.ge.s32.totalorder %s36, 2
    %s38 = scalar_select %p37, 0, %s36
    %s39 = ssub.s32 %s19, %s38
    %s40 = ssub.s32 %s20, %s34
    %s41 = sor.u32 %s39, %s40
    %p42 = scmp.eq.s32.totalorder %s41, 0
    %s44 = sadd.s32 %s43, 1
    %s45 = scalar_select %p42, %s43, %s44
    %p48 = pneg %p42
    %p49 = scmp.eq.s32.totalorder %s12, 15
    %p50 = por %p48, %p49
    %p51 = scmp.ne.s32.totalorder %s43, %s46
    %p52 = scmp.eq.s32.totalorder %s12, 0
    %p53 = por %p51, %p52
    %p54 = scmp.ne.s32.totalorder %s43, %s46
    %p55 = scmp.eq.s32.totalorder %s17, 15
    %p56 = por %p54, %p55
    %p57 = scmp.ne.s32.totalorder %s46, %s47
    %p58 = scmp.eq.s32.totalorder %s17, 0
    %p59 = por %p57, %p58
    %p60 = scmp.ne.s32.totalorder %s46, %s47
    %p61 = scmp.eq.s32.totalorder %s18, 15
    %p62 = por %p60, %p61
    %p64 = scmp.ne.s32.totalorder %s47, %s63
    %p65 = scmp.eq.s32.totalorder %s18, 0
    %p66 = por %p64, %p65
    %s67 = ssub.s32 %s21, %s30
    %p68 = scmp.eq.s32.totalorder %s67, 0
    %s70 = sadd.s32 %s69, 1
    %s71 = scalar_select %p68, %s69, %s70
    %p74 = pneg %p68
    %p75 = scmp.eq.s32.totalorder %s12, 15
    %p76 = por %p74, %p75
    %p77 = scmp.ne.s32.totalorder %s69, %s72
    %p78 = scmp.eq.s32.totalorder %s12, 0
    %p79 = por %p77, %p78
    %p80 = scmp.ne.s32.totalorder %s69, %s72
    %p81 = scmp.eq.s32.totalorder %s17, 15
    %p82 = por %p80, %p81
    %p83 = scmp.ne.s32.totalorder %s72, %s73
    %p84 = scmp.eq.s32.totalorder %s17, 0
    %p85 = por %p83, %p84
    %p86 = scmp.ne.s32.totalorder %s72, %s73
    %p87 = scmp.eq.s32.totalorder %s18, 15
    %p88 = por %p86, %p87
    %p90 = scmp.ne.s32.totalorder %s73, %s89
    %p91 = scmp.eq.s32.totalorder %s18, 0
    %p92 = por %p90, %p91
    %s93 = ssub.s32 %s21, %s30
    %p94 = scmp.eq.s32.totalorder %s93, 0
    %s96 = sadd.s32 %s95, 1
    %s97 = scalar_select %p94, %s95, %s96
    %p100 = pneg %p94
    %p101 = scmp.eq.s32.totalorder %s12, 15
    %p102 = por %p100, %p101
    %p103 = scmp.ne.s32.totalorder %s95, %s98
    %p104 = scmp.eq.s32.totalorder %s12, 0
    %p105 = por %p103, %p104
    %p106 = scmp.ne.s32.totalorder %s95, %s98
    %p107 = scmp.eq.s32.totalorder %s17, 15
    %p108 = por %p106, %p107
    %p109 = scmp.ne.s32.totalorder %s98, %s99
    %p110 = scmp.eq.s32.totalorder %s17, 0
    %p111 = por %p109, %p110
    %p112 = scmp.ne.s32.totalorder %s98, %s99
    %p113 = scmp.eq.s32.totalorder %s18, 15
    %p114 = por %p112, %p113
    %p116 = scmp.ne.s32.totalorder %s99, %s115
    %p117 = scmp.eq.s32.totalorder %s18, 0
    %p118 = por %p116, %p117
    %s119 = ssub.s32 %s19, %s38
    %s120 = ssub.s32 %s21, %s30
    %s121 = sor.u32 %s119, %s120
    %s122 = ssub.s32 %s20, %s34
    %s123 = sor.u32 %s121, %s122
    %p124 = scmp.eq.s32.totalorder %s123, 0
    %s126 = sadd.s32 %s125, 1
    %s127 = scalar_select %p124, %s125, %s126
    %p130 = pneg %p124
    %p131 = scmp.eq.s32.totalorder %s12, 15
    %p132 = por %p130, %p131
    %p133 = scmp.ne.s32.totalorder %s125, %s128
    %p134 = scmp.eq.s32.totalorder %s12, 0
    %p135 = por %p133, %p134
    %p136 = scmp.ne.s32.totalorder %s125, %s128
    %p137 = scmp.eq.s32.totalorder %s17, 15
    %p138 = por %p136, %p137
    %p139 = scmp.ne.s32.totalorder %s128, %s129
    %p140 = scmp.eq.s32.totalorder %s17, 0
    %p141 = por %p139, %p140
    %p142 = scmp.ne.s32.totalorder %s128, %s129
    %p143 = scmp.eq.s32.totalorder %s18, 15
    %p144 = por %p142, %p143
    %p146 = scmp.ne.s32.totalorder %s129, %s145
    %p147 = scmp.eq.s32.totalorder %s18, 0
    %p148 = por %p146, %p147
    %s149 = ssub.s32 %s19, %s38
    %s150 = ssub.s32 %s21, %s30
    %s151 = sor.u32 %s149, %s150
    %s152 = ssub.s32 %s20, %s34
    %s153 = sor.u32 %s151, %s152
    %p154 = scmp.eq.s32.totalorder %s153, 0
    %s156 = sadd.s32 %s155, 1
    %s157 = scalar_select %p154, %s155, %s156
    %p160 = pneg %p154
    %p161 = scmp.eq.s32.totalorder %s12, 15
    %p162 = por %p160, %p161
    %p163 = scmp.ne.s32.totalorder %s155, %s158
    %p164 = scmp.eq.s32.totalorder %s12, 0
    %p165 = por %p163, %p164
    %p166 = scmp.ne.s32.totalorder %s155, %s158
    %p167 = scmp.eq.s32.totalorder %s17, 15
    %p168 = por %p166, %p167
    %p169 = scmp.ne.s32.totalorder %s158, %s159
    %p170 = scmp.eq.s32.totalorder %s17, 0
    %p171 = por %p169, %p170
    %p172 = scmp.ne.s32.totalorder %s158, %s159
    %p173 = scmp.eq.s32.totalorder %s18, 15
    %p174 = por %p172, %p173
    %p176 = scmp.ne.s32.totalorder %s159, %s175
    %p177 = scmp.eq.s32.totalorder %s18, 0
    %p178 = por %p176, %p177
    %s179 = ssub.s32 %s19, %s38
    %s180 = ssub.s32 %s21, %s30
    %s181 = sor.u32 %s179, %s180
    %s182 = ssub.s32 %s20, %s34
    %s183 = sor.u32 %s181, %s182
    %p184 = scmp.eq.s32.totalorder %s183, 0
    %s186 = sadd.s32 %s185, 1
    %s187 = scalar_select %p184, %s185, %s186
    %p190 = pneg %p184
    %p191 = scmp.eq.s32.totalorder %s12, 15
    %p192 = por %p190, %p191
    %p193 = scmp.ne.s32.totalorder %s185, %s188
    %p194 = scmp.eq.s32.totalorder %s12, 0
    %p195 = por %p193, %p194
    %p196 = scmp.ne.s32.totalorder %s185, %s188
    %p197 = scmp.eq.s32.totalorder %s17, 15
    %p198 = por %p196, %p197
    %p199 = scmp.ne.s32.totalorder %s188, %s189
    %p200 = scmp.eq.s32.totalorder %s17, 0
    %p201 = por %p199, %p200
    %p202 = scmp.ne.s32.totalorder %s188, %s189
    %p203 = scmp.eq.s32.totalorder %s18, 15
    %p204 = por %p202, %p203
    %p206 = scmp.ne.s32.totalorder %s189, %s205
    %p207 = scmp.eq.s32.totalorder %s18, 0
    %p208 = por %p206, %p207
    %p209 = scmp.le.s32.totalorder 1, %s12
    %p210 = scmp.lt.s32.totalorder %s12, 17
    %p211 = pnand %p209, %p210
    %p212 = pneg %p211
    // Predicated region
    $region9: #{tpu_custom_call.1} parent=5 // pred_check
      _
    $region10: #{tpu_custom_call.1} parent=5 // pred_check_branch
      %214 = sbr.rel (%p211) target = $region12
    $region11: #{tpu_custom_call.1} parent=5 // pred_region
      %s215 = ssub.s32 %s12, 1
    $region12: #{tpu_custom_call.1} parent=5 // pred_fallthru
      _
    %p216 = scmp.lt.s32.totalorder %s12, 16
    // Predicated region
    $region13: #{tpu_custom_call.1} parent=5 // pred_check
      %p217 = pneg %p216
    $region14: #{tpu_custom_call.1} parent=5 // pred_check_branch
      %219 = sbr.rel (%p217) target = $region16
    $region15: #{tpu_custom_call.1} parent=5 // pred_region
      // Predicated region
      $region17: #{tpu_custom_call.1} parent=15 // pred_check
        %p220 = pneg %p53
      $region18: #{tpu_custom_call.1} parent=15 // pred_check_branch
        %222 = sbr.rel (%p220) target = $region20
      $region19: #{tpu_custom_call.1} parent=15 // pred_region
        %p223 = scmp.lt.s32.totalorder %s19, 1
        %s224 = scalar_select %p223, %s19, 1
        %p225 = scmp.lt.s32.totalorder %s20, 1
        %s226 = scalar_select %p225, %s20, 1
        %s227 = smul.addr %s224, 2
        %s228 = sadd.s32 %s226, %s227
        %s229 = smul.addr %s228, 8
        %s230 = scalar_lea.vmem %s0, %s229
      $region20: #{tpu_custom_call.1} parent=15 // pred_fallthru
        _
      // Predicated region
      $region21: #{tpu_custom_call.1} parent=15 // pred_check
        %p231 = pneg %p79
      $region22: #{tpu_custom_call.1} parent=15 // pred_check_branch
        %233 = sbr.rel (%p231) target = $region24
      $region23: #{tpu_custom_call.1} parent=15 // pred_region
        %p234 = scmp.lt.s32.totalorder %s21, 3
        %s235 = scalar_select %p234, %s21, 3
        %s236 = smul.addr %s235, 4
        %s237 = smul.addr %s236, 8
        %s238 = scalar_lea.vmem %s1, %s237
      $region24: #{tpu_custom_call.1} parent=15 // pred_fallthru
        _
      // Predicated region
      $region25: #{tpu_custom_call.1} parent=15 // pred_check
        %p239 = pneg %p105
      $region26: #{tpu_custom_call.1} parent=15 // pred_check_branch
        %241 = sbr.rel (%p239) target = $region28
      $region27: #{tpu_custom_call.1} parent=15 // pred_region
        %p242 = scmp.lt.s32.totalorder %s21, 3
        %s243 = scalar_select %p242, %s21, 3
        %s244 = scalar_lea.vmem %s2, %s243
      $region28: #{tpu_custom_call.1} parent=15 // pred_fallthru
        _
    $region16: #{tpu_custom_call.1} parent=5 // pred_fallthru
      _
    %p245 = scmp.le.s32.totalorder 1, %s12
    %p246 = scmp.lt.s32.totalorder %s12, 17
    %p247 = pnand %p245, %p246
    %p248 = pneg %p247
    // Predicated region
    $region29: #{tpu_custom_call.1} parent=5 // pred_check
      _
    $region30: #{tpu_custom_call.1} parent=5 // pred_check_branch
      %250 = sbr.rel (%p247) target = $region32
    $region31: #{tpu_custom_call.1} parent=5 // pred_region
      %s251 = ssub.s32 %s12, 1
      %p252 = scmp.lt.s32.totalorder %s22, 1
      %s253 = scalar_select %p252, %s22, 1
      %p254 = scmp.lt.s32.totalorder %s23, 1
      %s255 = scalar_select %p254, %s23, 1
      %s256 = smul.addr %s253, 2
      %s257 = sadd.s32 %s255, %s256
      %s258 = smul.addr %s257, 8
      %s259 = scalar_lea.vmem %s0, %s258
      %p260 = pneg %p59
      %p261 = pneg %p56
      %p262 = scmp.lt.s32.totalorder %s24, 3
      %s263 = scalar_select %p262, %s24, 3
      %s264 = smul.addr %s263, 4
      %s265 = smul.addr %s264, 8
      %s266 = scalar_lea.vmem %s1, %s265
      %p267 = pneg %p85
      %p268 = pneg %p82
      %p269 = scmp.lt.s32.totalorder %s24, 3
      %s270 = scalar_select %p269, %s24, 3
      %s271 = scalar_lea.vmem %s2, %s270
      %p272 = pneg %p111
      %p273 = pneg %p108
      %p274 = pneg %p141
      %p275 = pneg %p138
      %p276 = scmp.lt.s32.totalorder %s22, 1
      %s277 = scalar_select %p276, %s22, 1
      %p278 = scmp.lt.s32.totalorder %s24, 3
      %s279 = scalar_select %p278, %s24, 3
      %p280 = scmp.lt.s32.totalorder %s23, 1
      %s281 = scalar_select %p280, %s23, 1
      %s282 = smul.addr %s279, 2
      %s283 = sadd.s32 %s281, %s282
      %s284 = smul.addr %s277, 8
      %s285 = sadd.s32 %s283, %s284
      %s286 = smul.addr %s285, 8
      %s287 = scalar_lea.vmem %s3, %s286
      %p288 = pneg %p171
      %p289 = pneg %p168
      %p290 = scmp.lt.s32.totalorder %s22, 1
      %s291 = scalar_select %p290, %s22, 1
      %p292 = scmp.lt.s32.totalorder %s24, 3
      %s293 = scalar_select %p292, %s24, 3
      %p294 = scmp.lt.s32.totalorder %s23, 1
      %s295 = scalar_select %p294, %s23, 1
      %s296 = smul.addr %s293, 2
      %s297 = sadd.s32 %s295, %s296
      %s298 = smul.addr %s291, 8
      %s299 = sadd.s32 %s297, %s298
      %s300 = smul.addr %s299, 8
      %s301 = scalar_lea.vmem %s4, %s300
      %p302 = pneg %p201
      %p303 = pneg %p198
      %p304 = scmp.lt.s32.totalorder %s22, 1
      %s305 = scalar_select %p304, %s22, 1
      %p306 = scmp.lt.s32.totalorder %s24, 3
      %s307 = scalar_select %p306, %s24, 3
      %p308 = scmp.lt.s32.totalorder %s23, 1
      %s309 = scalar_select %p308, %s23, 1
      %s310 = smul.addr %s307, 2
      %s311 = sadd.s32 %s309, %s310
      %s312 = smul.addr %s305, 8
      %s313 = sadd.s32 %s311, %s312
      %s314 = smul.addr %s313, 8
      %s315 = scalar_lea.vmem %s5, %s314
      %p316 = scmp.lt.s32.totalorder %s22, 1
      %s317 = scalar_select %p316, %s22, 1
      %p318 = scmp.lt.s32.totalorder %s23, 1
      %s319 = scalar_select %p318, %s23, 1
      %s320 = smul.addr %s317, 2
      %s321 = sadd.s32 %s319, %s320
      %s322 = smul.addr %s321, 8
      %s323 = scalar_lea.vmem %s0, %s322
      %p324 = scmp.lt.s32.totalorder %s24, 3
      %s325 = scalar_select %p324, %s24, 3
      %s326 = smul.addr %s325, 4
      %s327 = smul.addr %s326, 8
      %s328 = scalar_lea.vmem %s1, %s327
      %p329 = scmp.lt.s32.totalorder %s24, 3
      %s330 = scalar_select %p329, %s24, 3
      %s331 = scalar_lea.vmem %s2, %s330
      %p332 = scmp.lt.s32.totalorder %s22, 1
      %s333 = scalar_select %p332, %s22, 1
      %p334 = scmp.lt.s32.totalorder %s24, 3
      %s335 = scalar_select %p334, %s24, 3
      %p336 = scmp.lt.s32.totalorder %s23, 1
      %s337 = scalar_select %p336, %s23, 1
      %s338 = smul.addr %s335, 2
      %s339 = sadd.s32 %s337, %s338
      %s340 = smul.addr %s333, 8
      %s341 = sadd.s32 %s339, %s340
      %s342 = smul.addr %s341, 8
      %s343 = scalar_lea.vmem %s3, %s342
      %p344 = scmp.lt.s32.totalorder %s22, 1
      %s345 = scalar_select %p344, %s22, 1
      %p346 = scmp.lt.s32.totalorder %s24, 3
      %s347 = scalar_select %p346, %s24, 3
      %p348 = scmp.lt.s32.totalorder %s23, 1
      %s349 = scalar_select %p348, %s23, 1
      %s350 = smul.addr %s347, 2
      %s351 = sadd.s32 %s349, %s350
      %s352 = smul.addr %s345, 8
      %s353 = sadd.s32 %s351, %s352
      %s354 = smul.addr %s353, 8
      %s355 = scalar_lea.vmem %s4, %s354
      %p356 = scmp.lt.s32.totalorder %s22, 1
      %s357 = scalar_select %p356, %s22, 1
      %p358 = scmp.lt.s32.totalorder %s24, 3
      %s359 = scalar_select %p358, %s24, 3
      %p360 = scmp.lt.s32.totalorder %s23, 1
      %s361 = scalar_select %p360, %s23, 1
      %s362 = smul.addr %s359, 2
      %s363 = sadd.s32 %s361, %s362
      %s364 = smul.addr %s357, 8
      %s365 = sadd.s32 %s363, %s364
      %s366 = smul.addr %s365, 8
      %s367 = scalar_lea.vmem %s5, %s366
      %v368 = vld [vmem:[%s323] sm:$0xff]
      %v369 = vld [vmem:[%s328] sm:$0xff]
      %v370 = vld [vmem:[%s328 + $0x8] sm:$0xff]
      %v371 = vld [vmem:[%s328 + $0x10] sm:$0xff]
      %v372 = vld [vmem:[%s328 + $0x18] sm:$0xff]
      %v373 = vld [vmem:[%s331] sm:$0x1]
      %v375 = vlaneseq
      %v376 = vshrl.u32 %v375, 7
      %v377 = vsub.s32 0, %v376
      %v378 = vrot.slane %v373, %v377
      %vm380 = vcmask 261120
      %v382 = vsel %vm380, %v368, 0
      %384 = vmatprep.subr.mxu0 0.0
      %385 = vmatpush1.msra.mxu0 %v369
      %386 = vmatprep.subr.mxu0 0.0
      %387 = vmatpush1.msra.mxu0 %v370
      %388 = vmatprep.subr.mxu0 0.0
      %389 = vmatpush1.msra.mxu0 %v371
      %390 = vmatprep.subr.mxu0 0.0
      %391 = vmatpush1.msra.mxu0 %v372
      %392 = vmatprep.subr.mxu0 0.0
      %393 = vmatpush1.msra.mxu0 0.0
      %394 = vmatprep.subr.mxu0 0.0
      %395 = vmatpush1.msra.mxu0 0.0
      %396 = vmatprep.subr.mxu0 0.0
      %397 = vmatpush1.msra.mxu0 0.0
      %398 = vmatprep.subr.mxu0 0.0
      %399 = vmatpush1.msra.mxu0 0.0
      %400 = vmatprep.subr.mxu0 0.0
      %401 = vmatpush1.msra.mxu0 0.0
      %402 = vmatprep.subr.mxu0 0.0
      %403 = vmatpush1.msra.mxu0 0.0
      %404 = vmatprep.subr.mxu0 0.0
      %405 = vmatpush1.msra.mxu0 0.0
      %406 = vmatprep.subr.mxu0 0.0
      %407 = vmatpush1.msra.mxu0 0.0
      %408 = vmatprep.subr.mxu0 0.0
      %409 = vmatpush1.msra.mxu0 0.0
      %410 = vmatprep.subr.mxu0 0.0
      %411 = vmatpush1.msra.mxu0 0.0
      %412 = vmatprep.subr.mxu0 0.0
      %413 = vmatpush1.msra.mxu0 0.0
      %414 = vmatprep.subr.mxu0 0.0
      %415 = vmatpush1.msra.mxu0 0.0
      %416 = vmatprep.subr.mxu0 0.0
      %417 = vmatpush1.msra.mxu0 0.0
      %418 = vmatprep.subr.mxu0 0.0
      %419 = vmatpush1.msra.mxu0 0.0
      %420 = vmatprep.subr.mxu0 0.0
      %421 = vmatpush1.msra.mxu0 0.0
      %422 = vmatprep.subr.mxu0 0.0
      %423 = vmatpush1.msra.mxu0 0.0
      %424 = vmatprep.subr.mxu0 0.0
      %425 = vmatpush1.msra.mxu0 0.0
      %426 = vmatprep.subr.mxu0 0.0
      %427 = vmatpush1.msra.mxu0 0.0
      %428 = vmatprep.subr.mxu0 0.0
      %429 = vmatpush1.msra.mxu0 0.0
      %430 = vmatprep.subr.mxu0 0.0
      %431 = vmatpush1.msra.mxu0 0.0
      %432 = vmatprep.subr.mxu0 0.0
      %433 = vmatpush1.msra.mxu0 0.0
      %434 = vmatprep.subr.mxu0 0.0
      %435 = vmatpush1.msra.mxu0 0.0
      %436 = vmatprep.subr.mxu0 0.0
      %437 = vmatpush1.msra.mxu0 0.0
      %438 = vmatprep.subr.mxu0 0.0
      %439 = vmatpush1.msra.mxu0 0.0
      %440 = vmatprep.subr.mxu0 0.0
      %441 = vmatpush1.msra.mxu0 0.0
      %442 = vmatprep.subr.mxu0 0.0
      %443 = vmatpush1.msra.mxu0 0.0
      %444 = vmatprep.subr.mxu0 0.0
      %445 = vmatpush1.msra.mxu0 0.0
      %446 = vmatprep.subr.mxu0 0.0
      %447 = vmatpush1.msra.mxu0 0.0
      %448 = vmatprep.mubr.f32.mxu0 0.0
      %449 = vmatmul.mubr.f32.gmra.mrb[0].mxu0 %v382
      %v450 = vpop.f32.mrb[0].mxu0
      %v451 = vadd.f32 %v378, %v450
      %v452 = vpop.f32.mrb[0].mxu0
      %453 = vdwg.mxu0
      %vm454 = vcmask 64512
      %455 = vst.msk [vmem:[%s343] sm:$0xff] %vm454, %v451
      %457 = vrot.lane.b32.xlu0 %v451, 120
      %v458 = vpop.permute.xlu0 %457
      %460 = vst.msk [vmem:[%s355] sm:$0xff] %vm454, %v458
      %461 = vrot.lane.b32.xlu0 %v451, 112
      %v462 = vpop.permute.xlu0 %461
      %464 = vst.msk [vmem:[%s367] sm:$0xff] %vm454, %v462
      %p465 = scmp.lt.s32.totalorder %s22, 1
      %s466 = scalar_select %p465, %s22, 1
      %p467 = scmp.lt.s32.totalorder %s24, 3
      %s468 = scalar_select %p467, %s24, 3
      %p469 = scmp.lt.s32.totalorder %s23, 1
      %s470 = scalar_select %p469, %s23, 1
      %s471 = smul.addr %s468, 2
      %s472 = sadd.s32 %s470, %s471
      %s473 = smul.addr %s466, 8
      %s474 = sadd.s32 %s472, %s473
      %s475 = smul.addr %s474, 8
      %s476 = scalar_lea.vmem %s3, %s475
      %p477 = scmp.lt.s32.totalorder %s22, 1
      %s478 = scalar_select %p477, %s22, 1
      %p479 = scmp.lt.s32.totalorder %s24, 3
      %s480 = scalar_select %p479, %s24, 3
      %p481 = scmp.lt.s32.totalorder %s23, 1
      %s482 = scalar_select %p481, %s23, 1
      %s483 = smul.addr %s480, 2
      %s484 = sadd.s32 %s482, %s483
      %s485 = smul.addr %s478, 8
      %s486 = sadd.s32 %s484, %s485
      %s487 = smul.addr %s486, 8
      %s488 = scalar_lea.vmem %s4, %s487
      %p489 = scmp.lt.s32.totalorder %s22, 1
      %s490 = scalar_select %p489, %s22, 1
      %p491 = scmp.lt.s32.totalorder %s24, 3
      %s492 = scalar_select %p491, %s24, 3
      %p493 = scmp.lt.s32.totalorder %s23, 1
      %s494 = scalar_select %p493, %s23, 1
      %s495 = smul.addr %s492, 2
      %s496 = sadd.s32 %s494, %s495
      %s497 = smul.addr %s490, 8
      %s498 = sadd.s32 %s496, %s497
      %s499 = smul.addr %s498, 8
      %s500 = scalar_lea.vmem %s5, %s499
      // Predicated region
      $region33: #{tpu_custom_call.1} parent=31 // pred_check
        %p501 = pneg %p138
      $region34: #{tpu_custom_call.1} parent=31 // pred_check_branch
        %503 = sbr.rel (%p501) target = $region36
      $region35: #{tpu_custom_call.1} parent=31 // pred_region
        _
      $region36: #{tpu_custom_call.1} parent=31 // pred_fallthru
        _
      // Predicated region
      $region37: #{tpu_custom_call.1} parent=31 // pred_check
        %p504 = pneg %p168
      $region38: #{tpu_custom_call.1} parent=31 // pred_check_branch
        %506 = sbr.rel (%p504) target = $region40
      $region39: #{tpu_custom_call.1} parent=31 // pred_region
        _
      $region40: #{tpu_custom_call.1} parent=31 // pred_fallthru
        _
      // Predicated region
      $region41: #{tpu_custom_call.1} parent=31 // pred_check
        %p507 = pneg %p198
      $region42: #{tpu_custom_call.1} parent=31 // pred_check_branch
        %509 = sbr.rel (%p507) target = $region44
      $region43: #{tpu_custom_call.1} parent=31 // pred_region
        _
      $region44: #{tpu_custom_call.1} parent=31 // pred_fallthru
        _
    $region32: #{tpu_custom_call.1} parent=5 // pred_fallthru
      _
    %p510 = scmp.le.s32.totalorder 2, %s12
    // Predicated region
    $region45: #{tpu_custom_call.1} parent=5 // pred_check
      %p511 = pneg %p510
    $region46: #{tpu_custom_call.1} parent=5 // pred_check_branch
      %513 = sbr.rel (%p511) target = $region48
    $region47: #{tpu_custom_call.1} parent=5 // pred_region
      %s514 = ssub.s32 %s12, 2
      // Predicated region
      $region49: #{tpu_custom_call.1} parent=47 // pred_check
        %p515 = pneg %p144
      $region50: #{tpu_custom_call.1} parent=47 // pred_check_branch
        %517 = sbr.rel (%p515) target = $region52
      $region51: #{tpu_custom_call.1} parent=47 // pred_region
        %p518 = scmp.lt.s32.totalorder %s25, 1
        %s519 = scalar_select %p518, %s25, 1
        %p520 = scmp.lt.s32.totalorder %s27, 3
        %s521 = scalar_select %p520, %s27, 3
        %p522 = scmp.lt.s32.totalorder %s26, 1
        %s523 = scalar_select %p522, %s26, 1
        %s524 = smul.addr %s521, 2
        %s525 = sadd.s32 %s523, %s524
        %s526 = smul.addr %s519, 8
        %s527 = sadd.s32 %s525, %s526
        %s528 = smul.addr %s527, 8
        %s529 = scalar_lea.vmem %s3, %s528
      $region52: #{tpu_custom_call.1} parent=47 // pred_fallthru
        _
      // Predicated region
      $region53: #{tpu_custom_call.1} parent=47 // pred_check
        %p530 = pneg %p174
      $region54: #{tpu_custom_call.1} parent=47 // pred_check_branch
        %532 = sbr.rel (%p530) target = $region56
      $region55: #{tpu_custom_call.1} parent=47 // pred_region
        %p533 = scmp.lt.s32.totalorder %s25, 1
        %s534 = scalar_select %p533, %s25, 1
        %p535 = scmp.lt.s32.totalorder %s27, 3
        %s536 = scalar_select %p535, %s27, 3
        %p537 = scmp.lt.s32.totalorder %s26, 1
        %s538 = scalar_select %p537, %s26, 1
        %s539 = smul.addr %s536, 2
        %s540 = sadd.s32 %s538, %s539
        %s541 = smul.addr %s534, 8
        %s542 = sadd.s32 %s540, %s541
        %s543 = smul.addr %s542, 8
        %s544 = scalar_lea.vmem %s4, %s543
      $region56: #{tpu_custom_call.1} parent=47 // pred_fallthru
        _
      // Predicated region
      $region57: #{tpu_custom_call.1} parent=47 // pred_check
        %p545 = pneg %p204
      $region58: #{tpu_custom_call.1} parent=47 // pred_check_branch
        %547 = sbr.rel (%p545) target = $region60
      $region59: #{tpu_custom_call.1} parent=47 // pred_region
        %p548 = scmp.lt.s32.totalorder %s25, 1
        %s549 = scalar_select %p548, %s25, 1
        %p550 = scmp.lt.s32.totalorder %s27, 3
        %s551 = scalar_select %p550, %s27, 3
        %p552 = scmp.lt.s32.totalorder %s26, 1
        %s553 = scalar_select %p552, %s26, 1
        %s554 = smul.addr %s551, 2
        %s555 = sadd.s32 %s553, %s554
        %s556 = smul.addr %s549, 8
        %s557 = sadd.s32 %s555, %s556
        %s558 = smul.addr %s557, 8
        %s559 = scalar_lea.vmem %s5, %s558
      $region60: #{tpu_custom_call.1} parent=47 // pred_fallthru
        _
    $region48: #{tpu_custom_call.1} parent=5 // pred_fallthru
      _
  $region6: #{tpu_custom_call.1} parent=0 // loop_footer
    %s16 = sadd.s32 1, %s12
  $region7: #{tpu_custom_call.1} parent=0 // loop_footer_branch
    %11 = sbr.rel target = $region3
  $region8: #{tpu_custom_call.1} parent=0 // loop_exit
    _

</llo_original>
